<compile_context>
chip_gen: v7x
topology: tpu7x:2x2x1
jax: 0.10.0
libtpu: 0.0.40
codegen_flags: <defaults>
</compile_context>

<pallas_src>
import math

import jax
import jax.numpy as jnp
from jax import lax
from jax.experimental import pallas as pl
from jax.experimental.pallas import tpu as pltpu

LANE = 128
SUBLANE = 8


def _device_kind():
    try:
        return jax.devices()[0].device_kind.lower()
    except Exception:
        return ""


def _tpu_defaults():
    """Generation-aware (tile_rows, num_splits)."""
    kind = _device_kind()
    single_tc = any(t in kind for t in
                    ("v5e", "v5 lite", "v5lite", "v6e", "v6 lite", "v6lite"))
    if "7" in kind:        # v7x: ~3.2 TB/s HBM, 2 TCs -> big tiles + 2-way split
        return 8192, 2
    if single_tc:          # v5e / v6e: already near roofline, 1 TC
        return 4096, 1
    return 4096, 2         # other multi-core chips (v4 / v5p megacore, ...)


def _make_sse_kernel(*, tm, chunk, acc_rows, tiles_per_split, num_full,
                     needs_guard, use_alpha):
    """Build the per-tile SSE kernel (all sizes are static Python ints)."""
    n_chunks = tm // chunk
    fold = chunk // acc_rows

    def accumulate(x_ref, t_ref, alpha, acc_ref):
        zeros = jnp.zeros((acc_rows, LANE), jnp.float32)

        def chunk_body(j, acc):
            off = pl.multiple_of(j * chunk, chunk)
            xv = x_ref[pl.ds(off, chunk), :].astype(jnp.float32)
            tv = t_ref[pl.ds(off, chunk), :].astype(jnp.float32)
            d = (xv * alpha - tv) if use_alpha else (xv - tv)
            sq = d * d
            if fold > 1:
                # Layout-preserving reshape; short (fold-deep) elementwise fold
                # onto a wide (acc_rows, 128) slab -> no long serial add chain.
                return acc + jnp.sum(sq.reshape(fold, acc_rows, LANE), axis=0)
            return acc + sq

        acc = lax.fori_loop(0, n_chunks, chunk_body, zeros, unroll=True)
        acc_ref[...] += acc

    def kernel(*refs):
        if use_alpha:
            alpha_ref, x_ref, t_ref, part_ref, acc_ref = refs
            alpha = alpha_ref[0]
        else:
            x_ref, t_ref, part_ref, acc_ref = refs
            alpha = None

        c = pl.program_id(0)   # split (parallel) axis
        i = pl.program_id(1)   # row-tile (reduction) axis

        @pl.when(i == 0)
        def _():
            acc_ref[...] = jnp.zeros_like(acc_ref)

        if needs_guard:
            # Ceil-split grid: skip the (at most num_splits-1) padding steps.
            @pl.when(c * tiles_per_split + i < num_full)
            def _():
                accumulate(x_ref, t_ref, alpha, acc_ref)
        else:
            accumulate(x_ref, t_ref, alpha, acc_ref)

        @pl.when(i == tiles_per_split - 1)
        def _():
            part_ref[...] = acc_ref[...]

    return kernel


def content_loss_forward(x, target, alpha=1.0, *, tile_m=None, num_splits=None,
                         min_pallas_elements=1 << 18):
    """Pallas equivalent of ContentLoss.forward.

    Returns (input, loss) with loss = mean((alpha*input - target)**2)
    (PyTorch stores the loss on self and returns the input unchanged).
    """
    assert x.shape == target.shape, "input and target must have the same shape"
    count = x.size

    # alpha == 1.0 as a compile-time Python number -> drop the SMEM operand
    # and the per-element multiply entirely.
    alpha_static_one = isinstance(alpha, (int, float)) and float(alpha) == 1.0
    use_alpha = not alpha_static_one
    alpha_f = jnp.float32(alpha) if use_alpha else jnp.float32(1.0)

    def _xla_sse(xs, ts):
        xs = xs.astype(jnp.float32)
        ts = ts.astype(jnp.float32)
        d = (xs * alpha_f - ts) if use_alpha else (xs - ts)
        return jnp.sum(d * d)

    # Tiny tensors: kernel launch / pipeline warm-up dominates -> plain XLA.
    if count < max(min_pallas_elements, SUBLANE * LANE):
        return x, _xla_sse(x, target) / jnp.float32(count)

    def_tm, def_splits = _tpu_defaults()
    if tile_m is None:
        tile_m = def_tm
    if num_splits is None:
        num_splits = def_splits

    # ---- lane-dense (rows, 128) view; NO full-tensor padding ---------------
    # TODO(synk): in a real ContentLoss module the target slab is fixed and
    # could be prepared once at construction time instead of per forward.
    flat_x = x.reshape(-1)
    flat_t = target.reshape(-1)
    main = (count // LANE) * LANE
    if main == count:
        x2d = flat_x.reshape(-1, LANE)          # free reshape on the hot path
        t2d = flat_t.reshape(-1, LANE)
    else:
        # Rare path: kernel runs on the 128-divisible prefix; the <128-element
        # remainder is added by the XLA tail (no jnp.pad HBM copies).
        x2d = flat_x[:main].reshape(-1, LANE)
        t2d = flat_t[:main].reshape(-1, LANE)
    rows = x2d.shape[0]

    # ---- dtype-aware row tiling ---------------------------------------------
    itemsize = min(jnp.dtype(x.dtype).itemsize, jnp.dtype(target.dtype).itemsize)
    pack = SUBLANE * max(1, 4 // max(1, itemsize))   # 8 f32 / 16 bf16 / 32 i8|fp8
    tm = min(tile_m, rows)
    if tm >= 512:
        tm -= tm % 512          # 512 is a multiple of every packing (8/16/32)
        chunk = 512
    else:
        tm -= tm % pack
        chunk = tm
    if tm == 0:
        return x, _xla_sse(x, target) / jnp.float32(count)
    acc_rows = math.gcd(chunk, 64)               # wide (<=64,128) accumulator

    num_full = rows // tm
    if num_full < 2 * num_splits:                # not enough tiles to split
        num_splits = 1
    tiles_per_split = -(-num_full // num_splits)  # ceil: all full tiles in-kernel
    needs_guard = num_splits * tiles_per_split != num_full
    tps = tiles_per_split

    if needs_guard:
        last_tile = num_full - 1

        def tile_idx(c, i):
            return (jnp.minimum(c * tps + i, last_tile), 0)
    else:
        def tile_idx(c, i):
            return (c * tps + i, 0)

    kernel = _make_sse_kernel(tm=tm, chunk=chunk, acc_rows=acc_rows,
                              tiles_per_split=tps, num_full=num_full,
                              needs_guard=needs_guard, use_alpha=use_alpha)

    in_specs = [pl.BlockSpec((tm, LANE), tile_idx),     # input
                pl.BlockSpec((tm, LANE), tile_idx)]     # target
    operands = [x2d, t2d]
    if use_alpha:
        in_specs = [pl.BlockSpec(memory_space=pltpu.MemorySpace.SMEM)] + in_specs
        operands = [jnp.asarray(alpha, dtype=jnp.float32).reshape(1)] + operands

    used = num_full * tm * LANE
    bytes_per = (jnp.dtype(x.dtype).itemsize + jnp.dtype(target.dtype).itemsize)

    parts = pl.pallas_call(
        kernel,
        out_shape=jax.ShapeDtypeStruct((num_splits, acc_rows, LANE), jnp.float32),
        grid_spec=pltpu.PrefetchScalarGridSpec(
            num_scalar_prefetch=0,
            grid=(num_splits, tps),
            in_specs=in_specs,
            out_specs=pl.BlockSpec((None, acc_rows, LANE), lambda c, i: (c, 0, 0)),
            scratch_shapes=[pltpu.VMEM((acc_rows, LANE), jnp.float32)],
        ),
        compiler_params=pltpu.CompilerParams(
            # TODO(synk): profile on v7x; if the plain "parallel" split axis
            # does not shard across the two TensorCores, switch it to
            # pltpu.CORE_PARALLEL (num_splits == number of TCs).
            dimension_semantics=("parallel", "arbitrary"),
            vmem_limit_bytes=48 << 20,
        ),
        cost_estimate=pl.CostEstimate(
            flops=4 * used,
            bytes_accessed=used * bytes_per + num_splits * acc_rows * LANE * 4,
            transcendentals=0,
        ),
    )(*operands)

    sse = jnp.sum(parts)

    # Ragged tail: leftover rows (< tm) plus the sub-128 element remainder —
    # bounded by < tm*128 + 128 elements -> one tiny fused XLA reduction.
    if used < count:
        sse = sse + _xla_sse(flat_x[used:], flat_t[used:])

    loss = sse / jnp.float32(count)
    return x, loss


if __name__ == "__main__":
    def ref_loss(xx, tt, a):
        return jnp.mean((a * xx.astype(jnp.float32) - tt.astype(jnp.float32)) ** 2)

    keys = jax.random.split(jax.random.PRNGKey(0), 12)

    # (a) small NCHW conv feature map, forced through the Pallas path (alpha=1
    #     specialization, single tile).
    x = jax.random.normal(keys[0], (2, 4, 16, 16), dtype=jnp.float32)
    t = jax.random.normal(keys[1], (2, 4, 16, 16), dtype=jnp.float32)
    out, loss = jax.block_until_ready(
        content_loss_forward(x, t, alpha=1.0, min_pallas_elements=0))
    assert jnp.array_equal(out, x)
    assert jnp.allclose(loss, ref_loss(x, t, 1.0), rtol=1e-5, atol=1e-6), loss

    # (b) ragged row count, alpha != 1 (SMEM path), forced 2-way split with a
    #     guarded (ceil-split) grid, XLA row tail.
    x = jax.random.normal(keys[2], (1, 8, 36, 40), dtype=jnp.float32)  # 90 rows
    t = jax.random.normal(keys[3], (1, 8, 36, 40), dtype=jnp.float32)
    out, loss = jax.block_until_ready(
        content_loss_forward(x, t, alpha=0.75, tile_m=8, num_splits=2,
                             min_pallas_elements=0))
    assert jnp.array_equal(out, x)
    assert jnp.allclose(loss, ref_loss(x, t, 0.75), rtol=1e-5, atol=1e-6), loss

    # (c) total not divisible by 128 -> prefix slab + sub-128 XLA remainder.
    x = jax.random.normal(keys[4], (1, 5, 17, 13), dtype=jnp.float32)  # 1105 elems
    t = jax.random.normal(keys[5], (1, 5, 17, 13), dtype=jnp.float32)
    out, loss = jax.block_until_ready(
        content_loss_forward(x, t, alpha=1.25, min_pallas_elements=0))
    assert jnp.array_equal(out, x)
    assert jnp.allclose(loss, ref_loss(x, t, 1.25), rtol=1e-5, atol=1e-6), loss

    # (d) default dispatch: tiny tensor takes the XLA fast path.
    out, loss = jax.block_until_ready(content_loss_forward(x, t, alpha=1.25))
    assert jnp.allclose(loss, ref_loss(x, t, 1.25), rtol=1e-5, atol=1e-6), loss

    # (e) multi-chunk fori_loop fold + unguarded 2-way split (4096 rows).
    x = jax.random.normal(keys[6], (4, 8, 128, 128), dtype=jnp.float32)
    t = jax.random.normal(keys[7], (4, 8, 128, 128), dtype=jnp.float32)
    out, loss = jax.block_until_ready(
        content_loss_forward(x, t, alpha=1.0, tile_m=1024, num_splits=2,
                             min_pallas_elements=0))
    assert jnp.array_equal(out, x)
    assert jnp.allclose(loss, ref_loss(x, t, 1.0), rtol=1e-5, atol=1e-6), loss

    # (f) bf16 inputs: dtype-aware sublane packing (tm % 16 == 0).
    x = jax.random.normal(keys[8], (2, 4, 32, 32), dtype=jnp.bfloat16)
    t = jax.random.normal(keys[9], (2, 4, 32, 32), dtype=jnp.bfloat16)
    out, loss = jax.block_until_ready(
        content_loss_forward(x, t, alpha=0.5, min_pallas_elements=0))
    assert jnp.array_equal(out, x)
    assert jnp.allclose(loss, ref_loss(x, t, 0.5), rtol=1e-3, atol=1e-5), loss

    print("KERNEL_OK")
</pallas_src>

<mosaic_0001>
module attributes {stable_mosaic.version = 11 : i64} {
  func.func @kernel(%arg0: i32, %arg1: i32, %arg2: memref<16x128xf32, #tpu.memory_space<vmem>>, %arg3: memref<16x128xf32, #tpu.memory_space<vmem>>, %arg4: memref<1x16x128xf32, #tpu.memory_space<vmem>>, %arg5: memref<16x128xf32, #tpu.memory_space<vmem>>) attributes {dimension_semantics = [#tpu.dimension_semantics<parallel>, #tpu.dimension_semantics<arbitrary>], iteration_bounds = array<i64: 1, 1>, scalar_prefetch = 0 : i64, scratch_operands = 1 : i64, tpu.core_type = #tpu.core_type<tc>, window_params = [{transform_indices = @transform_0, window_bounds = array<i64: 16, 128>}, {transform_indices = @transform_1, window_bounds = array<i64: 16, 128>}, {transform_indices = @transform_2, window_bounds = array<i64: 1, 16, 128>}]} {
    %c0_i32 = arith.constant 0 : i32
    %0 = arith.cmpi eq, %arg1, %c0_i32 : i32
    %1 = arith.extui %0 : i1 to i32
    %c0_i32_0 = arith.constant 0 : i32
    %2 = arith.cmpi ne, %1, %c0_i32_0 : i32
    scf.if %2 {
      %cst_9 = arith.constant 0.000000e+00 : f32
      %19 = vector.broadcast %cst_9 : f32 to vector<16x128xf32>
      %c0_10 = arith.constant 0 : index
      %c0_11 = arith.constant 0 : index
      %20 = vector.load %arg5[%c0_10, %c0_11] : memref<16x128xf32, #tpu.memory_space<vmem>>, vector<16x128xf32>
      tpu.vector_store %arg5[%c0_10, %c0_11], %19 {strides = array<i32>} : memref<16x128xf32, #tpu.memory_space<vmem>>, vector<16x128xf32>,
    } else {
    }
    %cst = arith.constant 0.000000e+00 : f32
    %3 = vector.broadcast %cst : f32 to vector<16x128xf32>
    %c0_i32_1 = arith.constant 0 : i32
    %c16_i32 = arith.constant 16 : i32
    %4 = arith.muli %c0_i32_1, %c16_i32 : i32
    %5 = tpu.assume_multiple %4, 16 : i32
    %6 = arith.index_cast %5 : i32 to index
    %c0 = arith.constant 0 : index
    %7 = vector.load %arg2[%6, %c0] : memref<16x128xf32, #tpu.memory_space<vmem>>, vector<16x128xf32>
    %8 = arith.index_cast %5 : i32 to index
    %c0_2 = arith.constant 0 : index
    %9 = vector.load %arg3[%8, %c0_2] : memref<16x128xf32, #tpu.memory_space<vmem>>, vector<16x128xf32>
    %10 = arith.subf %7, %9 : vector<16x128xf32>
    %11 = arith.mulf %10, %10 : vector<16x128xf32>
    %12 = arith.addf %3, %11 : vector<16x128xf32>
    %c1_i32 = arith.constant 1 : i32
    %c0_3 = arith.constant 0 : index
    %c0_4 = arith.constant 0 : index
    %13 = vector.load %arg5[%c0_3, %c0_4] : memref<16x128xf32, #tpu.memory_space<vmem>>, vector<16x128xf32>
    %14 = arith.addf %13, %12 : vector<16x128xf32>
    %c0_5 = arith.constant 0 : index
    %c0_6 = arith.constant 0 : index
    %15 = vector.load %arg5[%c0_5, %c0_6] : memref<16x128xf32, #tpu.memory_space<vmem>>, vector<16x128xf32>
    tpu.vector_store %arg5[%c0_5, %c0_6], %14 {strides = array<i32>} : memref<16x128xf32, #tpu.memory_space<vmem>>, vector<16x128xf32>,
    %c0_i32_7 = arith.constant 0 : i32
    %16 = arith.cmpi eq, %arg1, %c0_i32_7 : i32
    %17 = arith.extui %16 : i1 to i32
    %c0_i32_8 = arith.constant 0 : i32
    %18 = arith.cmpi ne, %17, %c0_i32_8 : i32
    scf.if %18 {
      %c0_9 = arith.constant 0 : index
      %c0_10 = arith.constant 0 : index
      %19 = vector.load %arg5[%c0_9, %c0_10] : memref<16x128xf32, #tpu.memory_space<vmem>>, vector<16x128xf32>
      %c0_11 = arith.constant 0 : index
      %c0_12 = arith.constant 0 : index
      %c0_13 = arith.constant 0 : index
      %20 = vector.load %arg4[%c0_11, %c0_12, %c0_13] : memref<1x16x128xf32, #tpu.memory_space<vmem>>, vector<1x16x128xf32>
      %21 = vector.shape_cast %20 : vector<1x16x128xf32> to vector<16x128xf32>
      %22 = vector.shape_cast %19 : vector<16x128xf32> to vector<1x16x128xf32>
      tpu.vector_store %arg4[%c0_11, %c0_12, %c0_13], %22 {strides = array<i32>} : memref<1x16x128xf32, #tpu.memory_space<vmem>>, vector<1x16x128xf32>,
    } else {
    }
    return
  }
  func.func @transform_0(%arg0: i32, %arg1: i32) -> (i32, i32) {
    %c1_i32 = arith.constant 1 : i32
    %0 = arith.muli %arg0, %c1_i32 : i32
    %1 = arith.addi %0, %arg1 : i32
    %c0_i32 = arith.constant 0 : i32
    %c0_i32_0 = arith.constant 0 : i32
    return %1, %c0_i32 : i32, i32
  }
  func.func @transform_1(%arg0: i32, %arg1: i32) -> (i32, i32) {
    %c1_i32 = arith.constant 1 : i32
    %0 = arith.muli %arg0, %c1_i32 : i32
    %1 = arith.addi %0, %arg1 : i32
    %c0_i32 = arith.constant 0 : i32
    %c0_i32_0 = arith.constant 0 : i32
    return %1, %c0_i32 : i32, i32
  }
  func.func @transform_2(%arg0: i32, %arg1: i32) -> (i32, i32, i32) {
    %c0_i32 = arith.constant 0 : i32
    %c0_i32_0 = arith.constant 0 : i32
    %c0_i32_1 = arith.constant 0 : i32
    return %arg0, %c0_i32, %c0_i32_0 : i32, i32, i32
  }
}

</mosaic_0001>

<llo_original>
// kernel: tpu_custom_call.1
$region0: #{tpu_custom_call.1}
  #allocation0 [shape = 'u32[]', space=smem, size = 0x4, offset = 0x4, fixed_abs, tag = 'smem constant byte address 0x4 - core index']
  #allocation1 [shape = 'u32[144,128]{1,0:T(1,128)}', space=vmem, size = 0x12000, scoped, tag = 'internal scratch']
  #allocation2 [shape = 'f32[16,128]{1,0:T(8,128)}', space=vmem, size = 0x2000, scoped, tag = 'scratch operand']
  %s0 = inlined_call_operand.hbm [shape: f32[16,128], index: 0, kind: input, shape index: {}]
  %s1 = inlined_call_operand.hbm [shape: f32[16,128], index: 1, kind: input, shape index: {}]
  %s2 = inlined_call_operand.hbm [shape: f32[1,16,128], index: 2, kind: output, shape index: {}]
  %s3 = sld [smem:[#allocation0]]
  $region34: #{tpu_custom_call.1} parent=0
    _
  %s5 = ssub.s32 1, %s3
  %s6 = scalar_select 0, %s5, %s3
  $region1: #{tpu_custom_call.1} parent=0
    #allocation3 [shape = 'u8[8192]{0}', space=vmem, size = 0x2000, scoped, tag = 'input window, operand 0, single buffered']
    #allocation4 [shape = 's32[1]{0}', space=sflag, size = 0x4, scoped, tag = 'scoped memory for tpu_custom_call.1']
    #allocation5 [shape = 's32[1]{0}', space=sflag, size = 0x4, scoped, tag = 'scoped memory for tpu_custom_call.1']
    #allocation6 [shape = 'u8[8192]{0}', space=vmem, size = 0x2000, scoped, tag = 'input window, operand 1, single buffered']
    #allocation7 [shape = 's32[1]{0}', space=sflag, size = 0x4, scoped, tag = 'scoped memory for tpu_custom_call.1']
    #allocation8 [shape = 'u8[8192]{0}', space=vmem, size = 0x2000, scoped, tag = 'output window, operand 0, single buffered']
    %7 = vsyncpa [#allocation4], 0
    %8 = vsyncpa [#allocation7], 0
    %9 = vsyncpa [#allocation5], 0
    // Predicated region
    $region2: #{tpu_custom_call.1} parent=1 // pred_check
      _
    $region3: #{tpu_custom_call.1} parent=1 // pred_check_branch
      %11 = sbr.rel (0) target = $region5
    $region4: #{tpu_custom_call.1} parent=1 // pred_region
      %s12 = sadd.s32 0, 0
      %s13 = smul.u32 2, %s12
      %s15 = ssub.s32 256, 256
      %16 = vsyncadd [#allocation4], %s15
      %s17 = smul.addr %s13, 128
      %s18 = scalar_lea.hbm %s0, %s17
      %s19 = sshll.u32 [#allocation3], 4
      %s20 = int_to_ptr.vmem [resolvable:$true] %s19
      %25 = dma.hbm_to_vmem [thread:$0]  %s18, 256, %s20, [#allocation4], 128, 128, 8
    $region5: #{tpu_custom_call.1} parent=1 // pred_fallthru
      _
    // Predicated region
    $region6: #{tpu_custom_call.1} parent=1 // pred_check
      _
    $region7: #{tpu_custom_call.1} parent=1 // pred_check_branch
      %27 = sbr.rel (0) target = $region9
    $region8: #{tpu_custom_call.1} parent=1 // pred_region
      %s28 = sadd.s32 0, 0
      %s29 = smul.u32 2, %s28
      %s31 = ssub.s32 256, 256
      %32 = vsyncadd [#allocation7], %s31
      %s33 = smul.addr %s29, 128
      %s34 = scalar_lea.hbm %s1, %s33
      %s35 = sshll.u32 [#allocation6], 4
      %s36 = int_to_ptr.vmem [resolvable:$true] %s35
      %41 = dma.hbm_to_vmem [thread:$0]  %s34, 256, %s36, [#allocation7], 128, 128, 8
    $region9: #{tpu_custom_call.1} parent=1 // pred_fallthru
      _
    // Predicated region
    $region10: #{tpu_custom_call.1} parent=1 // pred_check
      _
    $region11: #{tpu_custom_call.1} parent=1 // pred_check_branch
      %43 = sbr.rel (0) target = $region13
    $region12: #{tpu_custom_call.1} parent=1 // pred_region
      %44 = dma.done [#allocation4], 256
    $region13: #{tpu_custom_call.1} parent=1 // pred_fallthru
      _
    // Predicated region
    $region14: #{tpu_custom_call.1} parent=1 // pred_check
      _
    $region15: #{tpu_custom_call.1} parent=1 // pred_check_branch
      %46 = sbr.rel (0) target = $region17
    $region16: #{tpu_custom_call.1} parent=1 // pred_region
      %47 = dma.done [#allocation7], 256
    $region17: #{tpu_custom_call.1} parent=1 // pred_fallthru
      _
    %s48 = sadd.s32 0, 0
    %s49 = smul.u32 2, %s48
    %s50 = sadd.s32 0, 0
    %s51 = smul.u32 2, %s50
    %p52 = scmp.eq.s32.totalorder 0, 0
    // Predicated region
    $region18: #{tpu_custom_call.1} parent=1 // pred_check
      %p53 = pneg %p52
    $region19: #{tpu_custom_call.1} parent=1 // pred_check_branch
      %55 = sbr.rel (%p53) target = $region21
    $region20: #{tpu_custom_call.1} parent=1 // pred_region
      %56 = vst [vmem:[#allocation2] sm:$0xff] 0.0
      %57 = vst [vmem:[#allocation2 + $0x8] sm:$0xff] 0.0
    $region21: #{tpu_custom_call.1} parent=1 // pred_fallthru
      _
    %v58 = vld [vmem:[#allocation3] sm:$0xff]
    %v59 = vld [vmem:[#allocation3 + $0x8] sm:$0xff]
    %v60 = vld [vmem:[#allocation6] sm:$0xff]
    %v61 = vld [vmem:[#allocation6 + $0x8] sm:$0xff]
    %v62 = vsub.f32 %v58, %v60
    %v63 = vsub.f32 %v59, %v61
    %v64 = vmul.f32 %v62, %v62
    %v65 = vmul.f32 %v63, %v63
    %v66 = vadd.f32 %v64, 0.0
    %v67 = vadd.f32 %v65, 0.0
    %v68 = vld [vmem:[#allocation2] sm:$0xff]
    %v69 = vld [vmem:[#allocation2 + $0x8] sm:$0xff]
    %v70 = vadd.f32 %v68, %v66
    %v71 = vadd.f32 %v69, %v67
    %72 = vst [vmem:[#allocation2] sm:$0xff] %v70
    %73 = vst [vmem:[#allocation2 + $0x8] sm:$0xff] %v71
    // Predicated region
    $region22: #{tpu_custom_call.1} parent=1 // pred_check
      %p74 = pneg %p52
    $region23: #{tpu_custom_call.1} parent=1 // pred_check_branch
      %76 = sbr.rel (%p74) target = $region25
    $region24: #{tpu_custom_call.1} parent=1 // pred_region
      %v77 = vld [vmem:[#allocation2] sm:$0xff]
      %v78 = vld [vmem:[#allocation2 + $0x8] sm:$0xff]
      %79 = vst [vmem:[#allocation8] sm:$0xff] %v77
      %80 = vst [vmem:[#allocation8 + $0x8] sm:$0xff] %v78
    $region25: #{tpu_custom_call.1} parent=1 // pred_fallthru
      _
    // Predicated region
    $region26: #{tpu_custom_call.1} parent=1 // pred_check
      _
    $region27: #{tpu_custom_call.1} parent=1 // pred_check_branch
      %82 = sbr.rel (0) target = $region29
    $region28: #{tpu_custom_call.1} parent=1 // pred_region
      %s84 = ssub.s32 256, 256
      %85 = vsyncadd [#allocation5], %s84
      %s86 = sshll.u32 [#allocation8], 4
      %s87 = int_to_ptr.vmem [resolvable:$true] %s86
      %92 = dma.vmem_to_hbm [thread:$0]  %s87, 256, %s2, [#allocation5], 128, 128, 8
    $region29: #{tpu_custom_call.1} parent=1 // pred_fallthru
      _
    // Predicated region
    $region30: #{tpu_custom_call.1} parent=1 // pred_check
      _
    $region31: #{tpu_custom_call.1} parent=1 // pred_check_branch
      %94 = sbr.rel (0) target = $region33
    $region32: #{tpu_custom_call.1} parent=1 // pred_region
      %95 = dma.done [#allocation5], 256
    $region33: #{tpu_custom_call.1} parent=1 // pred_fallthru
      _
    %96 = vsyncpa [#allocation4], 1
    %97 = vsyncpa [#allocation7], 1
    %98 = vsyncpa [#allocation5], 1

</llo_original>
